<compile_context>
chip_gen: v7x
topology: tpu7x:2x2x1
jax: 0.10.0
libtpu: 0.0.40
codegen_flags: <defaults>
</compile_context>

<pallas_src>
import numpy as np
import jax
import jax.numpy as jnp
from jax.experimental import pallas as pl
from jax.experimental.pallas import tpu as pltpu


def _listnet_uq_kernel(coef_ref, x_ref, y_ref, len_ref, out_ref):
    x = x_ref[...]                      # (GB, G) per-group scores (zero padded)
    y = y_ref[...]                      # (GB, G) per-group targets (zero padded)
    n = len_ref[...]                    # (GB, 1) valid item count (0 on pad rows)
    coef = coef_ref[0]                  # annealing coefficient (scalar, SMEM)

    lane = jax.lax.broadcasted_iota(jnp.int32, x.shape, dimension=1)
    valid = lane < n.astype(jnp.int32)                       # (GB, G) bool
    maskf = valid.astype(jnp.float32)
    inv_n = 1.0 / jnp.maximum(n, 1.0)                        # (GB, 1)

    # pred_p = item / sum(item)  ->  log(pred_p) = log(x) - log(sum x)
    sum_x = jnp.sum(x, axis=-1, keepdims=True)               # pads are exactly 0
    log_sum_x = jnp.log(jnp.where(sum_x == 0.0, 1.0, sum_x))
    log_p = jnp.log(jnp.where(valid, x, 1.0)) - log_sum_x    # finite on pad lanes

    # targ_p = softmax(targets): stable (max-subtracted), masked; exp computed once.
    y_m = jnp.where(valid, y, jnp.float32(-1e30))
    y_sh = y_m - jnp.max(y_m, axis=-1, keepdims=True)
    ey = jnp.exp(y_sh) * maskf                               # exactly 0 on pads
    sum_ey = jnp.sum(ey, axis=-1, keepdims=True)
    sum_ey = jnp.where(sum_ey == 0.0, 1.0, sum_ey)
    q = ey / sum_ey                                          # targ_p
    log_q = y_sh - jnp.log(sum_ey)

    # real_loss = KLDivLoss(log pred_p, targ_p, 'batchmean')
    #           = sum_i q_i * (log q_i - log p_i) / group_len
    consist = log_q - log_p                                  # log(targ_p / pred_p)
    kl = jnp.sum(jnp.where(valid, q * consist, 0.0),
                 axis=-1, keepdims=True) * inv_n             # (GB, 1)

    # penalty = |consist * (item - 1)|, averaged over the group
    penalty = jnp.abs(consist * (x - 1.0))
    pen_mean = jnp.sum(jnp.where(valid, penalty, 0.0),
                       axis=-1, keepdims=True) * inv_n       # (GB, 1)

    group_loss = kl + coef * pen_mean                        # exactly 0 on pad rows
    out_ref[...] = jnp.broadcast_to(group_loss, out_ref.shape)


def listnet_with_uq(score, scope, targets, max_coeff, epoch, epochs, gpu=None):
    """Pallas equivalent of Listnet_with_uq.forward.

    score, targets: per-document arrays of total length sum(scope) (flattened);
    scope: python list of per-group sizes. Returns a shape-(1,) float32 array.
    """
    # TODO(synk): torch.cuda.set_device / .cuda(gpu) device placement has no
    # Pallas equivalent; the `gpu` argument is ignored on TPU.
    scope = [int(s) for s in scope]
    num_groups = len(scope)
    n_items = int(sum(scope))

    s_np = np.asarray(score, np.float32).reshape(-1)
    t_np = np.asarray(targets, np.float32).reshape(-1)
    assert s_np.shape[0] == n_items and t_np.shape[0] == n_items

    # Lane-dense padding of the item axis; groups packed along sublanes.
    g_max = max(scope)
    G = max(128, ((g_max + 127) // 128) * 128)

    # Group-rows per block: big (amortize per-step overhead), multiple of 8,
    # sized so the double-buffered working set stays well under v7x's VMEM.
    NG8 = max(8, ((num_groups + 7) // 8) * 8)
    GB = min(256, NG8)
    while GB > 8 and GB * G * 16 > (16 << 20):   # 2 inputs x 2 buffers x 4B
        GB = max(8, (GB // 2) // 8 * 8)
    NG_pad = ((num_groups + GB - 1) // GB) * GB
    num_blocks = NG_pad // GB

    # Host-side vectorized packing (no traced .at[].set loop).
    row_idx = np.repeat(np.arange(num_groups), scope)
    starts = np.concatenate([[0], np.cumsum(scope)[:-1]]).astype(np.int64)
    col_idx = np.arange(n_items) - np.repeat(starts, scope)

    def pack(flat):
        buf = np.zeros((NG_pad, G), np.float32)
        buf[row_idx, col_idx] = flat
        return jnp.asarray(buf)

    x_p = pack(s_np)
    y_p = pack(t_np)

    len_np = np.zeros((NG_pad, 1), np.float32)
    len_np[:num_groups, 0] = np.asarray(scope, np.float32)
    len_p = jnp.asarray(len_np)

    coef_val = float(max_coeff) * (float(epoch) / (float(epochs) - 1.0)) ** 3
    coef = jnp.asarray([coef_val], jnp.float32)

    out = pl.pallas_call(
        _listnet_uq_kernel,
        out_shape=jax.ShapeDtypeStruct((NG_pad, 128), jnp.float32),
        grid=(num_blocks,),
        in_specs=[
            pl.BlockSpec(memory_space=pltpu.MemorySpace.SMEM),   # coef (scalar)
            pl.BlockSpec((GB, G), lambda g: (g, 0)),             # scores
            pl.BlockSpec((GB, G), lambda g: (g, 0)),             # targets
            pl.BlockSpec((GB, 1), lambda g: (g, 0)),             # group lengths
        ],
        out_specs=pl.BlockSpec((GB, 128), lambda g: (g, 0)),
        compiler_params=pltpu.CompilerParams(
            dimension_semantics=("parallel",)),
    )(coef, x_p, y_p, len_p)

    # Pad rows are exactly 0, so a full sum is safe; divide by the true count.
    total = jnp.sum(out[:, 0])
    return (total / num_groups).reshape(1)


def _reference_numpy(score, scope, targets, max_coeff, epoch, epochs):
    """Literal re-implementation of the PyTorch forward in numpy (float64)."""
    score = np.asarray(score, np.float64).reshape(-1)
    targets = np.asarray(targets, np.float64).reshape(-1)
    coef = max_coeff * (epoch / (epochs - 1)) ** 3
    losses = 0.0
    off = 0
    for s in scope:
        item = score[off:off + s]
        bt = targets[off:off + s]
        off += s
        pred_p = item / np.sum(item)
        e = np.exp(bt - np.max(bt))
        targ_p = e / np.sum(e)
        real_loss = np.sum(targ_p * (np.log(targ_p) - np.log(pred_p))) / s
        consist = np.log(targ_p / pred_p)
        residue = consist * (item - 1.0)
        penalty = np.abs(residue)
        loss = real_loss + coef * penalty
        losses += np.mean(loss)
    return np.array([losses / len(scope)], dtype=np.float32)


if __name__ == "__main__":
    key = jax.random.PRNGKey(0)
    k1, k2 = jax.random.split(key)

    scope = [3, 5, 4, 7]               # 4 query groups, 19 documents total
    n = sum(scope)
    # Scores must be positive (the reference takes log(pred_p)).
    score = jax.random.uniform(k1, (n,), jnp.float32, minval=0.1, maxval=1.0)
    targets = jax.random.normal(k2, (n,), jnp.float32)
    max_coeff, epoch, epochs = 1.0, 3, 10

    out = listnet_with_uq(score, scope, targets, max_coeff, epoch, epochs,
                          gpu=None)
    out = jax.block_until_ready(out)

    ref = _reference_numpy(np.asarray(score), scope, np.asarray(targets),
                           max_coeff, epoch, epochs)
    assert out.shape == (1,), out.shape
    assert np.allclose(np.asarray(out), ref, rtol=2e-4, atol=1e-5), (out, ref)
    print("KERNEL_OK")
</pallas_src>

<mosaic_0001>
module attributes {stable_mosaic.version = 11 : i64} {
  func.func @_listnet_uq_kernel(%arg0: i32, %arg1: memref<1xf32, #tpu.memory_space<smem>>, %arg2: memref<8x128xf32, #tpu.memory_space<vmem>>, %arg3: memref<8x128xf32, #tpu.memory_space<vmem>>, %arg4: memref<8x1xf32, #tpu.memory_space<vmem>>, %arg5: memref<8x128xf32, #tpu.memory_space<vmem>>) attributes {dimension_semantics = [#tpu.dimension_semantics<parallel>], iteration_bounds = array<i64: 1>, scalar_prefetch = 0 : i64, scratch_operands = 0 : i64, tpu.core_type = #tpu.core_type<tc>, window_params = [{transform_indices = @transform_0, window_bounds = array<i64: 1>}, {transform_indices = @transform_1, window_bounds = array<i64: 8, 128>}, {transform_indices = @transform_2, window_bounds = array<i64: 8, 128>}, {transform_indices = @transform_3, window_bounds = array<i64: 8, 1>}, {transform_indices = @transform_4, window_bounds = array<i64: 8, 128>}]} {
    %c0 = arith.constant 0 : index
    %c0_0 = arith.constant 0 : index
    %0 = vector.load %arg2[%c0, %c0_0] : memref<8x128xf32, #tpu.memory_space<vmem>>, vector<8x128xf32>
    %c0_1 = arith.constant 0 : index
    %c0_2 = arith.constant 0 : index
    %1 = vector.load %arg3[%c0_1, %c0_2] : memref<8x128xf32, #tpu.memory_space<vmem>>, vector<8x128xf32>
    %c0_3 = arith.constant 0 : index
    %c0_4 = arith.constant 0 : index
    %2 = vector.load %arg4[%c0_3, %c0_4] : memref<8x1xf32, #tpu.memory_space<vmem>>, vector<8x1xf32>
    %c0_5 = arith.constant 0 : index
    %3 = memref.load %arg1[%c0_5] : memref<1xf32, #tpu.memory_space<smem>>
    %4 = tpu.iota {dimensions = array<i32: 1>} : vector<8x128xi32>
    %5 = arith.fptosi %2 : vector<8x1xf32> to vector<8x1xi32>
    %6 = vector.broadcast %5 : vector<8x1xi32> to vector<8x128xi32>
    %7 = arith.cmpi slt, %4, %6 : vector<8x128xi32>
    %8 = arith.extui %7 : vector<8x128xi1> to vector<8x128xi32>
    %9 = arith.sitofp %8 : vector<8x128xi32> to vector<8x128xf32>
    %cst = arith.constant 1.000000e+00 : f32
    %10 = vector.broadcast %cst : f32 to vector<8x1xf32>
    %11 = arith.maximumf %2, %10 : vector<8x1xf32>
    %cst_6 = arith.constant 1.000000e+00 : f32
    %12 = vector.broadcast %cst_6 : f32 to vector<8x1xf32>
    %13 = arith.divf %12, %11 : vector<8x1xf32>
    %cst_7 = arith.constant dense<0.000000e+00> : vector<8xf32>
    %14 = vector.multi_reduction <add>, %0, %cst_7 [1] : vector<8x128xf32> to vector<8xf32>
    %15 = vector.shape_cast %14 : vector<8xf32> to vector<8x1xf32>
    %cst_8 = arith.constant 0.000000e+00 : f32
    %16 = vector.broadcast %cst_8 : f32 to vector<8x1xf32>
    %17 = arith.cmpf oeq, %15, %16 : vector<8x1xf32>
    %cst_9 = arith.constant 1.000000e+00 : f32
    %18 = vector.broadcast %cst_9 : f32 to vector<8x1xf32>
    %19 = arith.select %17, %18, %15 : vector<8x1xi1>, vector<8x1xf32>
    %20 = math.log %19 : vector<8x1xf32>
    %cst_10 = arith.constant 1.000000e+00 : f32
    %21 = vector.broadcast %cst_10 : f32 to vector<8x128xf32>
    %22 = arith.select %7, %0, %21 : vector<8x128xi1>, vector<8x128xf32>
    %23 = math.log %22 : vector<8x128xf32>
    %24 = vector.broadcast %20 : vector<8x1xf32> to vector<8x128xf32>
    %25 = arith.subf %23, %24 : vector<8x128xf32>
    %cst_11 = arith.constant -1.000000e+30 : f32
    %26 = vector.broadcast %cst_11 : f32 to vector<8x128xf32>
    %27 = arith.select %7, %1, %26 : vector<8x128xi1>, vector<8x128xf32>
    %cst_12 = arith.constant dense<0xFF800000> : vector<8xf32>
    %28 = vector.multi_reduction <maximumf>, %27, %cst_12 [1] : vector<8x128xf32> to vector<8xf32>
    %29 = vector.shape_cast %28 : vector<8xf32> to vector<8x1xf32>
    %30 = vector.broadcast %29 : vector<8x1xf32> to vector<8x128xf32>
    %31 = arith.subf %27, %30 : vector<8x128xf32>
    %32 = math.exp %31 : vector<8x128xf32>
    %33 = arith.mulf %32, %9 : vector<8x128xf32>
    %cst_13 = arith.constant dense<0.000000e+00> : vector<8xf32>
    %34 = vector.multi_reduction <add>, %33, %cst_13 [1] : vector<8x128xf32> to vector<8xf32>
    %35 = vector.shape_cast %34 : vector<8xf32> to vector<8x1xf32>
    %cst_14 = arith.constant 0.000000e+00 : f32
    %36 = vector.broadcast %cst_14 : f32 to vector<8x1xf32>
    %37 = arith.cmpf oeq, %35, %36 : vector<8x1xf32>
    %cst_15 = arith.constant 1.000000e+00 : f32
    %38 = vector.broadcast %cst_15 : f32 to vector<8x1xf32>
    %39 = arith.select %37, %38, %35 : vector<8x1xi1>, vector<8x1xf32>
    %40 = vector.broadcast %39 : vector<8x1xf32> to vector<8x128xf32>
    %41 = arith.divf %33, %40 : vector<8x128xf32>
    %42 = math.log %39 : vector<8x1xf32>
    %43 = vector.broadcast %42 : vector<8x1xf32> to vector<8x128xf32>
    %44 = arith.subf %31, %43 : vector<8x128xf32>
    %45 = arith.subf %44, %25 : vector<8x128xf32>
    %46 = arith.mulf %41, %45 : vector<8x128xf32>
    %cst_16 = arith.constant 0.000000e+00 : f32
    %47 = vector.broadcast %cst_16 : f32 to vector<8x128xf32>
    %48 = arith.select %7, %46, %47 : vector<8x128xi1>, vector<8x128xf32>
    %cst_17 = arith.constant dense<0.000000e+00> : vector<8xf32>
    %49 = vector.multi_reduction <add>, %48, %cst_17 [1] : vector<8x128xf32> to vector<8xf32>
    %50 = vector.shape_cast %49 : vector<8xf32> to vector<8x1xf32>
    %51 = arith.mulf %50, %13 : vector<8x1xf32>
    %cst_18 = arith.constant 1.000000e+00 : f32
    %52 = vector.broadcast %cst_18 : f32 to vector<8x128xf32>
    %53 = arith.subf %0, %52 : vector<8x128xf32>
    %54 = arith.mulf %45, %53 : vector<8x128xf32>
    %55 = math.absf %54 : vector<8x128xf32>
    %cst_19 = arith.constant 0.000000e+00 : f32
    %56 = vector.broadcast %cst_19 : f32 to vector<8x128xf32>
    %57 = arith.select %7, %55, %56 : vector<8x128xi1>, vector<8x128xf32>
    %cst_20 = arith.constant dense<0.000000e+00> : vector<8xf32>
    %58 = vector.multi_reduction <add>, %57, %cst_20 [1] : vector<8x128xf32> to vector<8xf32>
    %59 = vector.shape_cast %58 : vector<8xf32> to vector<8x1xf32>
    %60 = arith.mulf %59, %13 : vector<8x1xf32>
    %61 = vector.broadcast %3 : f32 to vector<8x1xf32>
    %62 = arith.mulf %61, %60 : vector<8x1xf32>
    %63 = arith.addf %51, %62 : vector<8x1xf32>
    %64 = vector.shape_cast %63 : vector<8x1xf32> to vector<8x1xf32>
    %65 = vector.broadcast %64 : vector<8x1xf32> to vector<8x128xf32>
    %c0_21 = arith.constant 0 : index
    %c0_22 = arith.constant 0 : index
    %66 = vector.load %arg5[%c0_21, %c0_22] : memref<8x128xf32, #tpu.memory_space<vmem>>, vector<8x128xf32>
    tpu.vector_store %arg5[%c0_21, %c0_22], %65 {strides = array<i32>} : memref<8x128xf32, #tpu.memory_space<vmem>>, vector<8x128xf32>,
    return
  }
  func.func @transform_0(%arg0: i32) -> i32 {
    %c0_i32 = arith.constant 0 : i32
    %c0_i32_0 = arith.constant 0 : i32
    return %c0_i32 : i32
  }
  func.func @transform_1(%arg0: i32) -> (i32, i32) {
    %c0_i32 = arith.constant 0 : i32
    %c0_i32_0 = arith.constant 0 : i32
    return %arg0, %c0_i32 : i32, i32
  }
  func.func @transform_2(%arg0: i32) -> (i32, i32) {
    %c0_i32 = arith.constant 0 : i32
    %c0_i32_0 = arith.constant 0 : i32
    return %arg0, %c0_i32 : i32, i32
  }
  func.func @transform_3(%arg0: i32) -> (i32, i32) {
    %c0_i32 = arith.constant 0 : i32
    %c0_i32_0 = arith.constant 0 : i32
    return %arg0, %c0_i32 : i32, i32
  }
  func.func @transform_4(%arg0: i32) -> (i32, i32) {
    %c0_i32 = arith.constant 0 : i32
    %c0_i32_0 = arith.constant 0 : i32
    return %arg0, %c0_i32 : i32, i32
  }
}

</mosaic_0001>

<llo_original>
// kernel: tpu_custom_call.1
$region0: #{tpu_custom_call.1}
  #allocation0 [shape = 'u32[]', space=smem, size = 0x4, offset = 0x4, fixed_abs, tag = 'smem constant byte address 0x4 - core index']
  #allocation1 [shape = 'u32[144,128]{1,0:T(1,128)}', space=vmem, size = 0x12000, scoped, tag = 'internal scratch']
  #allocation2 [shape = 'f32[1]{0:T(128)S(6)}', space=smem, size = 0x200, scoped, tag = 'scoped memory for tpu_custom_call.1']
  %s0 = inlined_call_operand.<no memory space> [shape: f32[1], index: 0, kind: input, shape index: {}]
  %s1 = inlined_call_operand.vmem [shape: f32[8,128], index: 1, kind: input, shape index: {}]
  %s2 = inlined_call_operand.vmem [shape: f32[8,128], index: 2, kind: input, shape index: {}]
  %s3 = inlined_call_operand.vmem [shape: f32[8,1], index: 3, kind: input, shape index: {}]
  %s4 = inlined_call_operand.hbm [shape: f32[8,128], index: 4, kind: output, shape index: {}]
  %s5 = sld [smem:[#allocation0]]
  $region26: #{tpu_custom_call.1} parent=0
    _
  %s7 = ssub.s32 1, %s5
  %s8 = scalar_select 0, %s7, %s5
  %9 = sst [smem:[#allocation2]] %s0
  $region1: #{tpu_custom_call.1} parent=0
    #allocation3 [shape = 'u8[4096]{0}', space=vmem, size = 0x1000, scoped, tag = 'output window, operand 0, single buffered']
    #allocation4 [shape = 's32[1]{0}', space=sflag, size = 0x4, scoped, tag = 'scoped memory for tpu_custom_call.1']
    %10 = vsyncpa [#allocation4], 0
    // Predicated region
    $region2: #{tpu_custom_call.1} parent=1 // pred_check
      _
    $region3: #{tpu_custom_call.1} parent=1 // pred_check_branch
      %12 = sbr.rel (0) target = $region5
    $region4: #{tpu_custom_call.1} parent=1 // pred_region
      _
    $region5: #{tpu_custom_call.1} parent=1 // pred_fallthru
      _
    // Predicated region
    $region6: #{tpu_custom_call.1} parent=1 // pred_check
      _
    $region7: #{tpu_custom_call.1} parent=1 // pred_check_branch
      %14 = sbr.rel (0) target = $region9
    $region8: #{tpu_custom_call.1} parent=1 // pred_region
      _
    $region9: #{tpu_custom_call.1} parent=1 // pred_fallthru
      _
    // Predicated region
    $region10: #{tpu_custom_call.1} parent=1 // pred_check
      _
    $region11: #{tpu_custom_call.1} parent=1 // pred_check_branch
      %16 = sbr.rel (0) target = $region13
    $region12: #{tpu_custom_call.1} parent=1 // pred_region
      _
    $region13: #{tpu_custom_call.1} parent=1 // pred_fallthru
      _
    // Predicated region
    $region14: #{tpu_custom_call.1} parent=1 // pred_check
      _
    $region15: #{tpu_custom_call.1} parent=1 // pred_check_branch
      %18 = sbr.rel (0) target = $region17
    $region16: #{tpu_custom_call.1} parent=1 // pred_region
      _
    $region17: #{tpu_custom_call.1} parent=1 // pred_fallthru
      _
    %v19 = vld [vmem:[%s1] sm:$0xff]
    %v20 = vld [vmem:[%s2] sm:$0xff]
    %v21 = vld [vmem:[%s3] sm:$0xff]
    %s22 = sld [smem:[#allocation2]]
    %v23 = vlaneseq
    %v24 = vand.u32 %v23, 127
    %v25 = vcvt.f32.s32.to.zero.pseudo %v21
    %26 = vset.pattern.permute.xlu0 0
    %27 = vperm.xlu0 %26, %v25
    %v28 = vpop.permute.xlu0 %27
    %vm29 = vcmp.lt.s32.totalorder %v24, %v28
    %v30 = vsel %vm29, 1, 0
    %v31 = vcvt.s32.f32 %v30
    %v32 = vmax.f32 %v21, 1.0
    %v33 = vrcp.pop %v32
    %v34 = vmul.f32 1.0, %v33
    %35 = vadd.xlane.f32.xlu0 %v19
    %v36 = vpop.xlane.xlu0 %35
    %vm37 = vcmp.eq.f32.partialorder %v36, 0.0
    %v38 = vsel %vm37, 1.0, %v36
    %v39 = vlog2.pop %v38
    %v40 = vmul.f32 %v39, 0.6931472
    %v41 = vsel %vm29, %v19, 1.0
    %v42 = vlog2.pop %v41
    %v43 = vmul.f32 %v42, 0.6931472
    %v44 = vsub.f32 %v43, %v40
    %v45 = vsel %vm29, %v20, -1e+30
    %46 = vmax.xlane.f32.xlu0 %v45
    %v47 = vpop.xlane.xlu0 %46
    %v48 = vsub.f32 %v45, %v47
    %v49 = vmul.f32 %v48, 1.442695
    %v50 = vpow.pop %v49
    %v51 = vmul.f32 %v50, %v31
    %52 = vadd.xlane.f32.xlu0 %v51
    %v53 = vpop.xlane.xlu0 %52
    %vm54 = vcmp.eq.f32.partialorder %v53, 0.0
    %v55 = vsel %vm54, 1.0, %v53
    %v56 = vrcp.pop %v55
    %v57 = vmul.f32 %v51, %v56
    %v58 = vlog2.pop %v55
    %v59 = vmul.f32 %v58, 0.6931472
    %v60 = vsub.f32 %v48, %v59
    %v61 = vsub.f32 %v60, %v44
    %v62 = vmul.f32 %v57, %v61
    %v63 = vsel %vm29, %v62, 0.0
    %64 = vadd.xlane.f32.xlu0 %v63
    %v65 = vpop.xlane.xlu0 %64
    %v66 = vmul.f32 %v65, %v34
    %v67 = vsub.f32 %v19, 1.0
    %v68 = vmul.f32 %v61, %v67
    %v69 = vand.u32 2147483647, %v68
    %v70 = vsel %vm29, %v69, 0.0
    %71 = vadd.xlane.f32.xlu0 %v70
    %v72 = vpop.xlane.xlu0 %71
    %v73 = vmul.f32 %v72, %v34
    %v74 = vstv %s22
    %v75 = vmul.f32 %v74, %v73
    %v76 = vadd.f32 %v66, %v75
    %78 = vset.pattern.permute.xlu0 0
    %79 = vperm.xlu0 %78, %v76
    %v80 = vpop.permute.xlu0 %79
    %82 = vst [vmem:[#allocation3] sm:$0xff] %v80
    // Predicated region
    $region18: #{tpu_custom_call.1} parent=1 // pred_check
      _
    $region19: #{tpu_custom_call.1} parent=1 // pred_check_branch
      %84 = sbr.rel (0) target = $region21
    $region20: #{tpu_custom_call.1} parent=1 // pred_region
      %s86 = ssub.s32 128, 128
      %87 = vsyncadd [#allocation4], %s86
      %s89 = sshll.u32 [#allocation3], 4
      %s90 = int_to_ptr.vmem [resolvable:$true] %s89
      %92 = dma.vmem_to_hbm [thread:$0]  %s90, 128, %s4, [#allocation4]
    $region21: #{tpu_custom_call.1} parent=1 // pred_fallthru
      _
    // Predicated region
    $region22: #{tpu_custom_call.1} parent=1 // pred_check
      _
    $region23: #{tpu_custom_call.1} parent=1 // pred_check_branch
      %94 = sbr.rel (0) target = $region25
    $region24: #{tpu_custom_call.1} parent=1 // pred_region
      %95 = dma.done [#allocation4], 128
    $region25: #{tpu_custom_call.1} parent=1 // pred_fallthru
      _
    %96 = vsyncpa [#allocation4], 1

</llo_original>
